<compile_context>
chip_gen: v6e
topology: v6e:2x2x1
jax: 0.10.0
libtpu: 0.0.40
codegen_flags: <defaults>
</compile_context>

<pallas_src>
import functools

import jax
import jax.numpy as jnp
from jax.experimental import pallas as pl
from jax.experimental.pallas import tpu as pltpu


# ----------------------------- tiling helpers ------------------------------ #

def _pick_tile(dim, target, align):
    """Largest multiple of `align` that divides `dim` and is <= target.
    Falls back to the full dim (always a legal block size)."""
    if dim <= target:
        return dim
    t = (target // align) * align
    while t >= align:
        if dim % t == 0:
            return t
        t -= align
    return dim


_COMPILER_PARAMS = pltpu.CompilerParams(
    dimension_semantics=("parallel", "parallel", "arbitrary"),
    vmem_limit_bytes=48 * 1024 * 1024,
)


# ------------------- fused dense_h_to_4h + SiluAndMul ---------------------- #

def _h4h_silu_kernel(x_ref, wg_ref, wu_ref, o_ref, accg_ref, accu_ref):
    k = pl.program_id(2)

    @pl.when(k == 0)
    def _():
        accg_ref[...] = jnp.zeros_like(accg_ref)
        accu_ref[...] = jnp.zeros_like(accu_ref)

    x = x_ref[...]
    accg_ref[...] += jnp.dot(x, wg_ref[...], preferred_element_type=jnp.float32)
    accu_ref[...] += jnp.dot(x, wu_ref[...], preferred_element_type=jnp.float32)

    @pl.when(k == pl.num_programs(2) - 1)
    def _():
        g = accg_ref[...]
        u = accu_ref[...]
        o_ref[...] = (g * jax.nn.sigmoid(g) * u).astype(o_ref.dtype)


def _h4h_silu_bias_kernel(x_ref, wg_ref, wu_ref, bg_ref, bu_ref, o_ref,
                          accg_ref, accu_ref):
    k = pl.program_id(2)

    @pl.when(k == 0)
    def _():
        accg_ref[...] = jnp.zeros_like(accg_ref)
        accu_ref[...] = jnp.zeros_like(accu_ref)

    x = x_ref[...]
    accg_ref[...] += jnp.dot(x, wg_ref[...], preferred_element_type=jnp.float32)
    accu_ref[...] += jnp.dot(x, wu_ref[...], preferred_element_type=jnp.float32)

    @pl.when(k == pl.num_programs(2) - 1)
    def _():
        # bias added exactly once, in f32, at the final K step
        g = accg_ref[...] + bg_ref[...].astype(jnp.float32)
        u = accu_ref[...] + bu_ref[...].astype(jnp.float32)
        o_ref[...] = (g * jax.nn.sigmoid(g) * u).astype(o_ref.dtype)


def h_to_4h_silu(x, w_gate, w_up, b_gate=None, b_up=None,
                 *, tm=256, tn=256, tk=512):
    """x: [T, H], w_gate/w_up: [H, F] -> silu(x@w_gate + bg) * (x@w_up + bu): [T, F]."""
    T, H = x.shape
    F = w_gate.shape[1]
    tm = _pick_tile(T, tm, 8)
    tn = _pick_tile(F, tn, 128)
    tk = _pick_tile(H, tk, 128)
    grid = (T // tm, F // tn, H // tk)

    x_spec = pl.BlockSpec((tm, tk), lambda i, j, k: (i, k))
    w_spec = pl.BlockSpec((tk, tn), lambda i, j, k: (k, j))
    o_spec = pl.BlockSpec((tm, tn), lambda i, j, k: (i, j))
    scratch = [pltpu.VMEM((tm, tn), jnp.float32),
               pltpu.VMEM((tm, tn), jnp.float32)]

    if b_gate is None:
        return pl.pallas_call(
            _h4h_silu_kernel,
            out_shape=jax.ShapeDtypeStruct((T, F), x.dtype),
            grid_spec=pltpu.PrefetchScalarGridSpec(
                num_scalar_prefetch=0, grid=grid,
                in_specs=[x_spec, w_spec, w_spec],
                out_specs=o_spec, scratch_shapes=scratch),
            compiler_params=_COMPILER_PARAMS,
        )(x, w_gate, w_up)

    b_spec = pl.BlockSpec((1, tn), lambda i, j, k: (0, j))
    return pl.pallas_call(
        _h4h_silu_bias_kernel,
        out_shape=jax.ShapeDtypeStruct((T, F), x.dtype),
        grid_spec=pltpu.PrefetchScalarGridSpec(
            num_scalar_prefetch=0, grid=grid,
            in_specs=[x_spec, w_spec, w_spec, b_spec, b_spec],
            out_specs=o_spec, scratch_shapes=scratch),
        compiler_params=_COMPILER_PARAMS,
    )(x, w_gate, w_up, b_gate.reshape(1, -1), b_up.reshape(1, -1))


# --------------------------- dense_4h_to_h ---------------------------------- #

def _matmul_kernel(x_ref, w_ref, o_ref, acc_ref):
    k = pl.program_id(2)

    @pl.when(k == 0)
    def _():
        acc_ref[...] = jnp.zeros_like(acc_ref)

    acc_ref[...] += jnp.dot(x_ref[...], w_ref[...],
                            preferred_element_type=jnp.float32)

    @pl.when(k == pl.num_programs(2) - 1)
    def _():
        o_ref[...] = acc_ref[...].astype(o_ref.dtype)


def _matmul_bias_kernel(x_ref, w_ref, b_ref, o_ref, acc_ref):
    k = pl.program_id(2)

    @pl.when(k == 0)
    def _():
        acc_ref[...] = jnp.zeros_like(acc_ref)

    acc_ref[...] += jnp.dot(x_ref[...], w_ref[...],
                            preferred_element_type=jnp.float32)

    @pl.when(k == pl.num_programs(2) - 1)
    def _():
        o_ref[...] = (acc_ref[...] + b_ref[...].astype(jnp.float32)
                      ).astype(o_ref.dtype)


def linear(x, w, b=None, *, tm=256, tn=256, tk=512):
    """x: [T, K], w: [K, N], b: [N] or None -> [T, N]."""
    T, K = x.shape
    N = w.shape[1]
    tm = _pick_tile(T, tm, 8)
    tn = _pick_tile(N, tn, 128)
    tk = _pick_tile(K, tk, 128)
    grid = (T // tm, N // tn, K // tk)

    x_spec = pl.BlockSpec((tm, tk), lambda i, j, k: (i, k))
    w_spec = pl.BlockSpec((tk, tn), lambda i, j, k: (k, j))
    o_spec = pl.BlockSpec((tm, tn), lambda i, j, k: (i, j))
    scratch = [pltpu.VMEM((tm, tn), jnp.float32)]

    if b is None:
        return pl.pallas_call(
            _matmul_kernel,
            out_shape=jax.ShapeDtypeStruct((T, N), x.dtype),
            grid_spec=pltpu.PrefetchScalarGridSpec(
                num_scalar_prefetch=0, grid=grid,
                in_specs=[x_spec, w_spec],
                out_specs=o_spec, scratch_shapes=scratch),
            compiler_params=_COMPILER_PARAMS,
        )(x, w)

    b_spec = pl.BlockSpec((1, tn), lambda i, j, k: (0, j))
    return pl.pallas_call(
        _matmul_bias_kernel,
        out_shape=jax.ShapeDtypeStruct((T, N), x.dtype),
        grid_spec=pltpu.PrefetchScalarGridSpec(
            num_scalar_prefetch=0, grid=grid,
            in_specs=[x_spec, w_spec, b_spec],
            out_specs=o_spec, scratch_shapes=scratch),
        compiler_params=_COMPILER_PARAMS,
    )(x, w, b.reshape(1, -1))


# ----------------------------- GLMMLP forward ------------------------------- #

def glm_mlp_forward(params, hidden_states, *, tm=256, tn=256, tk=512):
    """Mirrors GLMMLP.forward: h_to_4h (merged gate/up) -> SiluAndMul -> 4h_to_h."""
    inter = h_to_4h_silu(hidden_states,
                         params["w_gate"], params["w_up"],
                         params.get("b_gate"), params.get("b_up"),
                         tm=tm, tn=tn, tk=tk)
    out = linear(inter, params["w_4h_to_h"], params.get("b_4h_to_h"),
                 tm=tm, tn=tn, tk=tk)
    return out


def init_params(key, hidden, ffn, add_bias):
    k1, k2, k3, k4, k5, k6 = jax.random.split(key, 6)
    # vLLM's MergedColumnParallelLinear([ffn]*2) == [gate | up] weight; split once
    # at init so the fused kernel streams each half with its own BlockSpec.
    w_merged = 0.02 * jax.random.normal(k1, (hidden, 2 * ffn), jnp.float32)
    params = dict(
        w_gate=w_merged[:, :ffn].astype(jnp.bfloat16),
        w_up=w_merged[:, ffn:].astype(jnp.bfloat16),
        w_4h_to_h=(0.02 * jax.random.normal(k2, (ffn, hidden), jnp.float32)
                   ).astype(jnp.bfloat16),
    )
    if add_bias:
        params.update(
            b_gate=0.01 * jax.random.normal(k3, (ffn,), jnp.float32),
            b_up=0.01 * jax.random.normal(k4, (ffn,), jnp.float32),
            b_4h_to_h=0.01 * jax.random.normal(k5, (hidden,), jnp.float32),
        )
    return params


def _reference(x, p):
    g = jnp.dot(x, p["w_gate"], preferred_element_type=jnp.float32)
    u = jnp.dot(x, p["w_up"], preferred_element_type=jnp.float32)
    if "b_gate" in p:
        g = g + p["b_gate"]
        u = u + p["b_up"]
    act = (g * jax.nn.sigmoid(g) * u).astype(jnp.bfloat16)
    o = jnp.dot(act, p["w_4h_to_h"], preferred_element_type=jnp.float32)
    if "b_4h_to_h" in p:
        o = o + p["b_4h_to_h"]
    return o.astype(jnp.bfloat16)


if __name__ == "__main__":
    key = jax.random.PRNGKey(0)
    T, HIDDEN, FFN = 8, 32, 64
    kx, kp = jax.random.split(key)
    x = jax.random.normal(kx, (T, HIDDEN), jnp.float32).astype(jnp.bfloat16)

    # add_bias_linear = False (typical ChatGLM config)
    params = init_params(kp, HIDDEN, FFN, add_bias=False)
    out = jax.block_until_ready(glm_mlp_forward(params, x))
    ref = _reference(x, params)
    assert out.shape == (T, HIDDEN)
    assert jnp.all(jnp.isfinite(out.astype(jnp.float32)))
    assert jnp.allclose(out.astype(jnp.float32), ref.astype(jnp.float32),
                        rtol=2e-2, atol=2e-3)

    # add_bias_linear = True path (exercises the bias kernel variants)
    params_b = init_params(kp, HIDDEN, FFN, add_bias=True)
    out_b = jax.block_until_ready(glm_mlp_forward(params_b, x))
    ref_b = _reference(x, params_b)
    assert jnp.allclose(out_b.astype(jnp.float32), ref_b.astype(jnp.float32),
                        rtol=2e-2, atol=2e-3)

    print("KERNEL_OK")
</pallas_src>

<mosaic_0001>
module attributes {stable_mosaic.version = 11 : i64} {
  func.func @_h4h_silu_kernel(%arg0: i32, %arg1: i32, %arg2: i32, %arg3: memref<8x32xbf16, #tpu.memory_space<vmem>>, %arg4: memref<32x64xbf16, #tpu.memory_space<vmem>>, %arg5: memref<32x64xbf16, #tpu.memory_space<vmem>>, %arg6: memref<8x64xbf16, #tpu.memory_space<vmem>>, %arg7: memref<8x64xf32, #tpu.memory_space<vmem>>, %arg8: memref<8x64xf32, #tpu.memory_space<vmem>>) attributes {dimension_semantics = [#tpu.dimension_semantics<parallel>, #tpu.dimension_semantics<parallel>, #tpu.dimension_semantics<arbitrary>], iteration_bounds = array<i64: 1, 1, 1>, scalar_prefetch = 0 : i64, scratch_operands = 2 : i64, tpu.core_type = #tpu.core_type<tc>, window_params = [{transform_indices = @transform_0, window_bounds = array<i64: 8, 32>}, {transform_indices = @transform_1, window_bounds = array<i64: 32, 64>}, {transform_indices = @transform_2, window_bounds = array<i64: 32, 64>}, {transform_indices = @transform_3, window_bounds = array<i64: 8, 64>}]} {
    %c0_i32 = arith.constant 0 : i32
    %0 = arith.cmpi eq, %arg2, %c0_i32 : i32
    %1 = arith.extui %0 : i1 to i32
    %c0_i32_0 = arith.constant 0 : i32
    %2 = arith.cmpi ne, %1, %c0_i32_0 : i32
    scf.if %2 {
      %cst_17 = arith.constant 0.000000e+00 : f32
      %17 = vector.broadcast %cst_17 : f32 to vector<8x64xf32>
      %c0_18 = arith.constant 0 : index
      %c0_19 = arith.constant 0 : index
      %18 = vector.load %arg7[%c0_18, %c0_19] : memref<8x64xf32, #tpu.memory_space<vmem>>, vector<8x64xf32>
      tpu.vector_store %arg7[%c0_18, %c0_19], %17 {strides = array<i32>} : memref<8x64xf32, #tpu.memory_space<vmem>>, vector<8x64xf32>,
      %cst_20 = arith.constant 0.000000e+00 : f32
      %19 = vector.broadcast %cst_20 : f32 to vector<8x64xf32>
      %c0_21 = arith.constant 0 : index
      %c0_22 = arith.constant 0 : index
      %20 = vector.load %arg8[%c0_21, %c0_22] : memref<8x64xf32, #tpu.memory_space<vmem>>, vector<8x64xf32>
      tpu.vector_store %arg8[%c0_21, %c0_22], %19 {strides = array<i32>} : memref<8x64xf32, #tpu.memory_space<vmem>>, vector<8x64xf32>,
    } else {
    }
    %c0 = arith.constant 0 : index
    %c0_1 = arith.constant 0 : index
    %3 = vector.load %arg3[%c0, %c0_1] : memref<8x32xbf16, #tpu.memory_space<vmem>>, vector<8x32xbf16>
    %c0_2 = arith.constant 0 : index
    %c0_3 = arith.constant 0 : index
    %4 = vector.load %arg7[%c0_2, %c0_3] : memref<8x64xf32, #tpu.memory_space<vmem>>, vector<8x64xf32>
    %c0_4 = arith.constant 0 : index
    %c0_5 = arith.constant 0 : index
    %5 = vector.load %arg4[%c0_4, %c0_5] : memref<32x64xbf16, #tpu.memory_space<vmem>>, vector<32x64xbf16>
    %cst = arith.constant dense<0.000000e+00> : vector<8x64xf32>
    %6 = tpu.matmul %3, %5, %cst {dimension_numbers = #tpu.dot_dimension_numbers<[1], [0], [0], [1], [0, 0, 1, 1], [], []>} : vector<8x32xbf16>, vector<32x64xbf16>, vector<8x64xf32> -> vector<8x64xf32>
    %7 = arith.addf %4, %6 : vector<8x64xf32>
    %c0_6 = arith.constant 0 : index
    %c0_7 = arith.constant 0 : index
    %8 = vector.load %arg7[%c0_6, %c0_7] : memref<8x64xf32, #tpu.memory_space<vmem>>, vector<8x64xf32>
    tpu.vector_store %arg7[%c0_6, %c0_7], %7 {strides = array<i32>} : memref<8x64xf32, #tpu.memory_space<vmem>>, vector<8x64xf32>,
    %c0_8 = arith.constant 0 : index
    %c0_9 = arith.constant 0 : index
    %9 = vector.load %arg8[%c0_8, %c0_9] : memref<8x64xf32, #tpu.memory_space<vmem>>, vector<8x64xf32>
    %c0_10 = arith.constant 0 : index
    %c0_11 = arith.constant 0 : index
    %10 = vector.load %arg5[%c0_10, %c0_11] : memref<32x64xbf16, #tpu.memory_space<vmem>>, vector<32x64xbf16>
    %cst_12 = arith.constant dense<0.000000e+00> : vector<8x64xf32>
    %11 = tpu.matmul %3, %10, %cst_12 {dimension_numbers = #tpu.dot_dimension_numbers<[1], [0], [0], [1], [0, 0, 1, 1], [], []>} : vector<8x32xbf16>, vector<32x64xbf16>, vector<8x64xf32> -> vector<8x64xf32>
    %12 = arith.addf %9, %11 : vector<8x64xf32>
    %c0_13 = arith.constant 0 : index
    %c0_14 = arith.constant 0 : index
    %13 = vector.load %arg8[%c0_13, %c0_14] : memref<8x64xf32, #tpu.memory_space<vmem>>, vector<8x64xf32>
    tpu.vector_store %arg8[%c0_13, %c0_14], %12 {strides = array<i32>} : memref<8x64xf32, #tpu.memory_space<vmem>>, vector<8x64xf32>,
    %c0_i32_15 = arith.constant 0 : i32
    %14 = arith.cmpi eq, %arg2, %c0_i32_15 : i32
    %15 = arith.extui %14 : i1 to i32
    %c0_i32_16 = arith.constant 0 : i32
    %16 = arith.cmpi ne, %15, %c0_i32_16 : i32
    scf.if %16 {
      %c0_17 = arith.constant 0 : index
      %c0_18 = arith.constant 0 : index
      %17 = vector.load %arg7[%c0_17, %c0_18] : memref<8x64xf32, #tpu.memory_space<vmem>>, vector<8x64xf32>
      %c0_19 = arith.constant 0 : index
      %c0_20 = arith.constant 0 : index
      %18 = vector.load %arg8[%c0_19, %c0_20] : memref<8x64xf32, #tpu.memory_space<vmem>>, vector<8x64xf32>
      %19 = arith.negf %17 : vector<8x64xf32>
      %20 = math.exp %19 : vector<8x64xf32>
      %cst_21 = arith.constant 1.000000e+00 : f32
      %21 = vector.broadcast %cst_21 : f32 to vector<8x64xf32>
      %22 = arith.addf %21, %20 : vector<8x64xf32>
      %23 = arith.divf %21, %22 : vector<8x64xf32>
      %24 = arith.mulf %17, %23 : vector<8x64xf32>
      %25 = arith.mulf %24, %18 : vector<8x64xf32>
      %26 = arith.truncf %25 : vector<8x64xf32> to vector<8x64xbf16>
      %c0_22 = arith.constant 0 : index
      %c0_23 = arith.constant 0 : index
      %27 = vector.load %arg6[%c0_22, %c0_23] : memref<8x64xbf16, #tpu.memory_space<vmem>>, vector<8x64xbf16>
      tpu.vector_store %arg6[%c0_22, %c0_23], %26 {strides = array<i32>} : memref<8x64xbf16, #tpu.memory_space<vmem>>, vector<8x64xbf16>,
    } else {
    }
    return
  }
  func.func @transform_0(%arg0: i32, %arg1: i32, %arg2: i32) -> (i32, i32) {
    %c0_i32 = arith.constant 0 : i32
    return %arg0, %arg2 : i32, i32
  }
  func.func @transform_1(%arg0: i32, %arg1: i32, %arg2: i32) -> (i32, i32) {
    %c0_i32 = arith.constant 0 : i32
    return %arg2, %arg1 : i32, i32
  }
  func.func @transform_2(%arg0: i32, %arg1: i32, %arg2: i32) -> (i32, i32) {
    %c0_i32 = arith.constant 0 : i32
    return %arg2, %arg1 : i32, i32
  }
  func.func @transform_3(%arg0: i32, %arg1: i32, %arg2: i32) -> (i32, i32) {
    %c0_i32 = arith.constant 0 : i32
    return %arg0, %arg1 : i32, i32
  }
}

</mosaic_0001>

<llo_original>
// kernel: tpu_custom_call.1
$region0: #{tpu_custom_call.1}
  #allocation0 [shape = 'u32[]', space=smem, size = 0x4, offset = 0x4, fixed_abs, tag = 'smem constant byte address 0x4 - core index']
  #allocation1 [shape = 'u32[144,128]{1,0:T(1,128)}', space=vmem, size = 0x12000, scoped, tag = 'internal scratch']
  #allocation2 [shape = 'f32[8,64]{1,0:T(8,128)}', space=vmem, size = 0x1000, scoped, tag = 'scratch operand']
  #allocation3 [shape = 'f32[8,64]{1,0:T(8,128)}', space=vmem, size = 0x1000, scoped, tag = 'scratch operand']
  %s0 = inlined_call_operand.hbm [shape: bf16[8,32], index: 0, kind: input, shape index: {}]
  %s1 = inlined_call_operand.hbm [shape: bf16[32,64], index: 1, kind: input, shape index: {}]
  %s2 = inlined_call_operand.hbm [shape: bf16[32,64], index: 2, kind: input, shape index: {}]
  %s3 = inlined_call_operand.hbm [shape: bf16[8,64], index: 3, kind: output, shape index: {}]
  %s4 = sld [smem:[#allocation0]]
  $region42: #{tpu_custom_call.1} parent=0
    _
  %s6 = ssub.s32 1, %s4
  %s7 = scalar_select 0, %s6, %s4
  $region1: #{tpu_custom_call.1} parent=0
    #allocation4 [shape = 'u8[2048]{0}', space=vmem, size = 0x800, scoped, tag = 'input window, operand 0, single buffered']
    #allocation5 [shape = 's32[1]{0}', space=sflag, size = 0x4, scoped, tag = 'scoped memory for tpu_custom_call.1']
    #allocation6 [shape = 's32[1]{0}', space=sflag, size = 0x4, scoped, tag = 'scoped memory for tpu_custom_call.1']
    #allocation7 [shape = 'u8[8192]{0}', space=vmem, size = 0x2000, scoped, tag = 'input window, operand 1, single buffered']
    #allocation8 [shape = 's32[1]{0}', space=sflag, size = 0x4, scoped, tag = 'scoped memory for tpu_custom_call.1']
    #allocation9 [shape = 'u8[8192]{0}', space=vmem, size = 0x2000, scoped, tag = 'input window, operand 2, single buffered']
    #allocation10 [shape = 'u8[2048]{0}', space=vmem, size = 0x800, scoped, tag = 'output window, operand 0, single buffered']
    %8 = vsyncpa [#allocation5], 0
    %9 = vsyncpa [#allocation8], 0
    %10 = vsyncpa [#allocation6], 0
    // Predicated region
    $region2: #{tpu_custom_call.1} parent=1 // pred_check
      _
    $region3: #{tpu_custom_call.1} parent=1 // pred_check_branch
      %12 = sbr.rel (0) target = $region5
    $region4: #{tpu_custom_call.1} parent=1 // pred_region
      %s14 = ssub.s32 64, 64
      %15 = vsyncadd [#allocation5], %s14
      %s17 = sshll.u32 [#allocation4], 4
      %s18 = int_to_ptr.vmem [resolvable:$true] %s17
      %20 = dma.hbm_to_vmem [thread:$0]  %s0, 64, %s18, [#allocation5]
    $region5: #{tpu_custom_call.1} parent=1 // pred_fallthru
      _
    // Predicated region
    $region6: #{tpu_custom_call.1} parent=1 // pred_check
      _
    $region7: #{tpu_custom_call.1} parent=1 // pred_check_branch
      %22 = sbr.rel (0) target = $region9
    $region8: #{tpu_custom_call.1} parent=1 // pred_region
      %s24 = ssub.s32 256, 256
      %25 = vsyncadd [#allocation8], %s24
      %s26 = sshll.u32 [#allocation7], 4
      %s27 = int_to_ptr.vmem [resolvable:$true] %s26
      %32 = dma.hbm_to_vmem [thread:$0]  %s1, 256, %s27, [#allocation8], 64, 64, 4
    $region9: #{tpu_custom_call.1} parent=1 // pred_fallthru
      _
    // Predicated region
    $region10: #{tpu_custom_call.1} parent=1 // pred_check
      _
    $region11: #{tpu_custom_call.1} parent=1 // pred_check_branch
      %34 = sbr.rel (0) target = $region13
    $region12: #{tpu_custom_call.1} parent=1 // pred_region
      %s36 = ssub.s32 256, 256
      %37 = vsyncadd [#allocation8], %s36
      %s38 = sshll.u32 [#allocation9], 4
      %s39 = int_to_ptr.vmem [resolvable:$true] %s38
      %44 = dma.hbm_to_vmem [thread:$0]  %s2, 256, %s39, [#allocation8], 64, 64, 4
    $region13: #{tpu_custom_call.1} parent=1 // pred_fallthru
      _
    // Predicated region
    $region14: #{tpu_custom_call.1} parent=1 // pred_check
      _
    $region15: #{tpu_custom_call.1} parent=1 // pred_check_branch
      %46 = sbr.rel (0) target = $region17
    $region16: #{tpu_custom_call.1} parent=1 // pred_region
      %47 = dma.done [#allocation5], 64
    $region17: #{tpu_custom_call.1} parent=1 // pred_fallthru
      _
    // Predicated region
    $region18: #{tpu_custom_call.1} parent=1 // pred_check
      _
    $region19: #{tpu_custom_call.1} parent=1 // pred_check_branch
      %49 = sbr.rel (0) target = $region21
    $region20: #{tpu_custom_call.1} parent=1 // pred_region
      %50 = dma.done [#allocation8], 256
    $region21: #{tpu_custom_call.1} parent=1 // pred_fallthru
      _
    // Predicated region
    $region22: #{tpu_custom_call.1} parent=1 // pred_check
      _
    $region23: #{tpu_custom_call.1} parent=1 // pred_check_branch
      %52 = sbr.rel (0) target = $region25
    $region24: #{tpu_custom_call.1} parent=1 // pred_region
      %53 = dma.done [#allocation8], 256
    $region25: #{tpu_custom_call.1} parent=1 // pred_fallthru
      _
    %p55 = scmp.eq.s32.totalorder 0, 0
    // Predicated region
    $region26: #{tpu_custom_call.1} parent=1 // pred_check
      %p56 = pneg %p55
    $region27: #{tpu_custom_call.1} parent=1 // pred_check_branch
      %58 = sbr.rel (%p56) target = $region29
    $region28: #{tpu_custom_call.1} parent=1 // pred_region
      %vm59 = vcmask 523264
      %60 = vst.msk [vmem:[#allocation2] sm:$0xff] %vm59, 0.0
      %61 = vst.msk [vmem:[#allocation3] sm:$0xff] %vm59, 0.0
    $region29: #{tpu_custom_call.1} parent=1 // pred_fallthru
      _
    %v62 = vld [vmem:[#allocation4] sm:$0xf]
    %v63 = vld [vmem:[#allocation2] sm:$0xff]
    %v64 = vld [vmem:[#allocation7] sm:$0xf]
    %v65 = vld [vmem:[#allocation7 + $0x4] sm:$0xf]
    %v66 = vld [vmem:[#allocation7 + $0x8] sm:$0xf]
    %v67 = vld [vmem:[#allocation7 + $0xc] sm:$0xf]
    %v72 = vunpack.c.l.b16 %v64
    %v73 = vunpack.c.l.b16 %v65
    %v74 = vunpack.c.l.b16 %v66
    %v75 = vunpack.c.l.b16 %v67
    %v76 = vpack.c.b16 %v73, %v72
    %v77 = vpack.c.b16 %v75, %v74
    %vm80 = vcmask 261120
    %v82 = vsel %vm80, %v62, 0
    %84 = vmatprep.subr.bf16.mxu0 0
    %85 = vmatpush1.bf16.msra.mxu0 0
    %86 = vmatprep.subr.bf16.mxu0 0
    %87 = vmatpush1.bf16.msra.mxu0 0
    %88 = vmatprep.subr.bf16.mxu0 0
    %89 = vmatpush1.bf16.msra.mxu0 0
    %90 = vmatprep.subr.bf16.mxu0 0
    %91 = vmatpush1.bf16.msra.mxu0 0
    %92 = vmatprep.subr.bf16.mxu0 0
    %93 = vmatpush1.bf16.msra.mxu0 0
    %94 = vmatprep.subr.bf16.mxu0 0
    %95 = vmatpush1.bf16.msra.mxu0 0
    %96 = vmatprep.subr.bf16.mxu0 0
    %97 = vmatpush1.bf16.msra.mxu0 %v77
    %98 = vmatprep.subr.bf16.mxu0 0
    %99 = vmatpush1.bf16.msra.mxu0 %v76
    %100 = vmatprep.subr.bf16.mxu0 0
    %101 = vmatpush2.bf16.msra.mxu0 0
    %102 = vmatprep.subr.bf16.mxu0 0
    %103 = vmatpush2.bf16.msra.mxu0 0
    %104 = vmatprep.subr.bf16.mxu0 0
    %105 = vmatpush2.bf16.msra.mxu0 0
    %106 = vmatprep.subr.bf16.mxu0 0
    %107 = vmatpush2.bf16.msra.mxu0 0
    %108 = vmatprep.subr.bf16.mxu0 0
    %109 = vmatpush2.bf16.msra.mxu0 0
    %110 = vmatprep.subr.bf16.mxu0 0
    %111 = vmatpush2.bf16.msra.mxu0 0
    %112 = vmatprep.subr.bf16.mxu0 0
    %113 = vmatpush2.bf16.msra.mxu0 0
    %114 = vmatprep.subr.bf16.mxu0 0
    %115 = vmatpush2.bf16.msra.mxu0 0
    %116 = vmatprep.mubr.bf16.mxu0 0
    %117 = vmatmul.mubr.bf16.gmra.mxu0 %v82
    %v118 = vpop.f32.mrf.mxu0
    %v119 = vadd.f32 0.0, %v118
    %v120 = vpop.f32.mrf.mxu0
    %v121 = vpop.f32.mrf.mxu0
    %v122 = vpop.f32.mrf.mxu0
    %123 = vdwg.mxu0
    %v124 = vadd.f32 %v63, %v119
    %vm125 = vcmask 523264
    %126 = vst.msk [vmem:[#allocation2] sm:$0xff] %vm125, %v124
    %v127 = vld [vmem:[#allocation3] sm:$0xff]
    %v128 = vld [vmem:[#allocation9] sm:$0xf]
    %v129 = vld [vmem:[#allocation9 + $0x4] sm:$0xf]
    %v130 = vld [vmem:[#allocation9 + $0x8] sm:$0xf]
    %v131 = vld [vmem:[#allocation9 + $0xc] sm:$0xf]
    %v136 = vunpack.c.l.b16 %v128
    %v137 = vunpack.c.l.b16 %v129
    %v138 = vunpack.c.l.b16 %v130
    %v139 = vunpack.c.l.b16 %v131
    %v140 = vpack.c.b16 %v137, %v136
    %v141 = vpack.c.b16 %v139, %v138
    %144 = vmatprep.subr.bf16.mxu0 0
    %145 = vmatpush1.bf16.msra.mxu0 0
    %146 = vmatprep.subr.bf16.mxu0 0
    %147 = vmatpush1.bf16.msra.mxu0 0
    %148 = vmatprep.subr.bf16.mxu0 0
    %149 = vmatpush1.bf16.msra.mxu0 0
    %150 = vmatprep.subr.bf16.mxu0 0
    %151 = vmatpush1.bf16.msra.mxu0 0
    %152 = vmatprep.subr.bf16.mxu0 0
    %153 = vmatpush1.bf16.msra.mxu0 0
    %154 = vmatprep.subr.bf16.mxu0 0
    %155 = vmatpush1.bf16.msra.mxu0 0
    %156 = vmatprep.subr.bf16.mxu0 0
    %157 = vmatpush1.bf16.msra.mxu0 %v141
    %158 = vmatprep.subr.bf16.mxu0 0
    %159 = vmatpush1.bf16.msra.mxu0 %v140
    %160 = vmatprep.subr.bf16.mxu0 0
    %161 = vmatpush2.bf16.msra.mxu0 0
    %162 = vmatprep.subr.bf16.mxu0 0
    %163 = vmatpush2.bf16.msra.mxu0 0
    %164 = vmatprep.subr.bf16.mxu0 0
    %165 = vmatpush2.bf16.msra.mxu0 0
    %166 = vmatprep.subr.bf16.mxu0 0
    %167 = vmatpush2.bf16.msra.mxu0 0
    %168 = vmatprep.subr.bf16.mxu0 0
    %169 = vmatpush2.bf16.msra.mxu0 0
    %170 = vmatprep.subr.bf16.mxu0 0
    %171 = vmatpush2.bf16.msra.mxu0 0
    %172 = vmatprep.subr.bf16.mxu0 0
    %173 = vmatpush2.bf16.msra.mxu0 0
    %174 = vmatprep.subr.bf16.mxu0 0
    %175 = vmatpush2.bf16.msra.mxu0 0
    %176 = vmatprep.mubr.bf16.mxu0 0
    %177 = vmatmul.mubr.bf16.gmra.mxu0 %v82
    %v178 = vpop.f32.mrf.mxu0
    %v179 = vadd.f32 0.0, %v178
    %v180 = vpop.f32.mrf.mxu0
    %v181 = vpop.f32.mrf.mxu0
    %v182 = vpop.f32.mrf.mxu0
    %183 = vdwg.mxu0
    %v184 = vadd.f32 %v127, %v179
    %185 = vst.msk [vmem:[#allocation3] sm:$0xff] %vm125, %v184
    // Predicated region
    $region30: #{tpu_custom_call.1} parent=1 // pred_check
      %p186 = pneg %p55
    $region31: #{tpu_custom_call.1} parent=1 // pred_check_branch
      %188 = sbr.rel (%p186) target = $region33
    $region32: #{tpu_custom_call.1} parent=1 // pred_region
      %v189 = vld [vmem:[#allocation2] sm:$0xff]
      %v190 = vld [vmem:[#allocation3] sm:$0xff]
      %v191 = vxor.u32 %v189, 2147483648
      %v192 = vmul.f32 %v191, 1.442695
      %v193 = vpow.pop %v192
      %v194 = vadd.f32 %v193, 1.0
      %v195 = vrcp.pop %v194
      %v196 = vmul.f32 1.0, %v195
      %v197 = vmul.f32 %v189, %v196
      %v198 = vmul.f32 %v197, %v190
      %v199 = vpack.c.bf16 %v198, %v198
      %vm200 = vcmask 519168
      %201 = vst.msk [vmem:[#allocation10] sm:$0xf] %vm200, %v199
    $region33: #{tpu_custom_call.1} parent=1 // pred_fallthru
      _
    // Predicated region
    $region34: #{tpu_custom_call.1} parent=1 // pred_check
      _
    $region35: #{tpu_custom_call.1} parent=1 // pred_check_branch
      %203 = sbr.rel (0) target = $region37
    $region36: #{tpu_custom_call.1} parent=1 // pred_region
      %s205 = ssub.s32 64, 64
      %206 = vsyncadd [#allocation6], %s205
      %s208 = sshll.u32 [#allocation10], 4
      %s209 = int_to_ptr.vmem [resolvable:$true] %s208
      %211 = dma.vmem_to_hbm [thread:$0]  %s209, 64, %s3, [#allocation6]
    $region37: #{tpu_custom_call.1} parent=1 // pred_fallthru
      _
    // Predicated region
    $region38: #{tpu_custom_call.1} parent=1 // pred_check
      _
    $region39: #{tpu_custom_call.1} parent=1 // pred_check_branch
      %213 = sbr.rel (0) target = $region41
    $region40: #{tpu_custom_call.1} parent=1 // pred_region
      %214 = dma.done [#allocation6], 64
    $region41: #{tpu_custom_call.1} parent=1 // pred_fallthru
      _
    %215 = vsyncpa [#allocation5], 1
    %216 = vsyncpa [#allocation8], 1
    %217 = vsyncpa [#allocation6], 1

</llo_original>
